<compile_context>
chip_gen: v7x
topology: tpu7x:2x2x1
jax: 0.10.0
libtpu: 0.0.40
codegen_flags: <defaults>
</compile_context>

<pallas_src>
import jax
import jax.numpy as jnp
from jax.experimental import pallas as pl
from jax.experimental.pallas import tpu as pltpu


def fasttext_kernel(tok_ref, emb_ref, w_ref, b_ref, o_ref):
    """One batch tile: token counts -> (counts @ table) -> (pooled @ W^T/S + b).

    tok_ref: VMEM (TB, S)      int32 token ids for this batch tile
    emb_ref: VMEM (V_pad, E)   embedding table, resident across all tiles
    w_ref:   VMEM (E, O_pad)   fc.weight^T pre-scaled by 1/S, lane-padded
    b_ref:   VMEM (1, O_pad)   fc.bias, lane-padded
    o_ref:   VMEM (TB, O_pad)  output tile (lane-dense)
    """
    TB, S = tok_ref.shape
    V_pad = emb_ref.shape[0]

    tok = tok_ref[...]                                            # (TB, S) int32
    iota_v = jax.lax.broadcasted_iota(jnp.int32, (TB, V_pad), 1)  # vocab ids/lane

    # Per-example token-count rows.  One lane-broadcast compare + add per
    # position; S is small, so a static unroll keeps everything in 2-D vregs
    # (no (1,E) masked stores, no per-example loop).
    counts = jnp.zeros((TB, V_pad), jnp.float32)
    for s in range(S):
        counts = counts + (tok[:, s:s + 1] == iota_v).astype(jnp.float32)

    # Gather + sum-pool as a single MXU matmul: counts @ table == sum of the
    # selected embedding rows.  Counts (<= S) are exactly representable even in
    # bf16, so match the table dtype for the MXU input.
    emb = emb_ref[...]
    pooled = jnp.dot(counts.astype(emb.dtype), emb,
                     preferred_element_type=jnp.float32)          # (TB, E) f32

    # Linear head; the 1/S mean scale is folded into w_ref.
    o_ref[...] = (
        jnp.dot(pooled, w_ref[...], preferred_element_type=jnp.float32)
        + b_ref[...]
    )


def fasttext_forward(x_tokens, emb_table, fc_w, fc_b, *, batch_tile=None):
    """FastText forward.

    x_tokens : (S, B) int32 token ids, PyTorch (seq_len, batch) layout.
    emb_table: (V, E) nn.Embedding.weight (f32 or bf16).
    fc_w     : (O, E) nn.Linear.weight;  fc_b: (O,) nn.Linear.bias.
    Returns (B, O) float32.
    """
    S, B = x_tokens.shape
    V, E = emb_table.shape
    O = fc_w.shape[0]

    LANE, SUB = 128, 8
    O_pad = ((O + LANE - 1) // LANE) * LANE
    V_pad = ((V + LANE - 1) // LANE) * LANE

    # Batch tiling: tiles are multiples of 8 sublanes and we always produce
    # >= 2 tiles so the ("parallel",) grid axis shards across both v7x
    # TensorCores (padding rows are sliced off; their cost is negligible).
    if batch_tile is None:
        batch_tile = min(256, max(SUB, SUB * pl.cdiv(pl.cdiv(B, 2), SUB)))
    n_tiles = max(2, pl.cdiv(B, batch_tile))
    B_pad = n_tiles * batch_tile

    # Tokens -> (B_pad, S) int32, padded batch rows use token 0 (sliced off).
    tok = jnp.transpose(x_tokens.astype(jnp.int32), (1, 0))       # (B, S)
    if B_pad != B:
        tok = jnp.pad(tok, ((0, B_pad - B), (0, 0)))

    # Zero-pad the vocab axis to a full lane multiple (padded rows never hit:
    # counts there are always zero).
    emb = emb_table if V_pad == V else jnp.pad(emb_table, ((0, V_pad - V), (0, 0)))

    # Fold 1/S into the tiny transposed weight; pad O to a full lane register.
    w_t = fc_w.astype(jnp.float32).T * (1.0 / S)                  # (E, O)
    w_t = jnp.pad(w_t, ((0, 0), (0, O_pad - O)))                  # (E, O_pad)
    bias = jnp.pad(fc_b.astype(jnp.float32), (0, O_pad - O)).reshape(1, O_pad)

    itemsize = jnp.dtype(emb.dtype).itemsize
    emb_bytes = V_pad * E * itemsize
    block_bytes = (2 * batch_tile * S * 4          # double-buffered token blocks
                   + E * O_pad * 4 + O_pad * 4     # resident weight + bias
                   + 2 * batch_tile * O_pad * 4)   # double-buffered output blocks
    # Generous but capped at 48 MiB so the same config is safe on v7x (64 MiB
    # physical VMEM) while still allowing ~24 MiB-class resident tables.
    vmem_limit = int(min(48 << 20, max(16 << 20, 2 * (emb_bytes + block_bytes))))

    cost = pl.CostEstimate(
        flops=(2 * B_pad * V_pad * E          # counts @ table
               + 2 * B_pad * E * O_pad        # pooled @ W^T
               + B_pad * S * V_pad),          # one-hot count build
        transcendentals=0,
        bytes_accessed=(B_pad * S * 4                 # token ids
                        + V_pad * E * itemsize        # embedding table
                        + E * O_pad * 4 + O_pad * 4   # weight + bias
                        + B_pad * O_pad * 4),         # output
    )

    out = pl.pallas_call(
        fasttext_kernel,
        out_shape=jax.ShapeDtypeStruct((B_pad, O_pad), jnp.float32),
        grid=(n_tiles,),
        in_specs=[
            pl.BlockSpec((batch_tile, S), lambda i: (i, 0)),   # per-tile tokens
            pl.BlockSpec((V_pad, E), lambda i: (0, 0)),        # resident table
            pl.BlockSpec((E, O_pad), lambda i: (0, 0)),        # resident weight
            pl.BlockSpec((1, O_pad), lambda i: (0, 0)),        # resident bias
        ],
        out_specs=pl.BlockSpec((batch_tile, O_pad), lambda i: (i, 0)),
        compiler_params=pltpu.CompilerParams(
            dimension_semantics=("parallel",),
            vmem_limit_bytes=vmem_limit,
        ),
        cost_estimate=cost,
    )(tok, emb, w_t, bias)

    return out[:B, :O]


if __name__ == "__main__":
    # Small, deterministic problem sizes consistent with the module.
    vocab_size = 100
    embedding_dim = 128
    output_dim = 8
    seq_len = 16
    batch = 8

    key = jax.random.PRNGKey(0)
    k_tok, k_emb, k_w, k_b = jax.random.split(key, 4)

    # Synthetic parameters with nn.Embedding / nn.Linear shapes.
    emb_table = jax.random.normal(k_emb, (vocab_size, embedding_dim), jnp.float32)
    fc_w = jax.random.normal(k_w, (output_dim, embedding_dim), jnp.float32) * 0.1
    fc_b = jax.random.normal(k_b, (output_dim,), jnp.float32) * 0.1

    # Tokens in PyTorch's (seq_len, batch) layout.
    x_tokens = jax.random.randint(k_tok, (seq_len, batch), 0, vocab_size, jnp.int32)

    out = fasttext_forward(x_tokens, emb_table, fc_w, fc_b)
    out = jax.block_until_ready(out)

    # Pure-JAX reference: gather, mean over seq (== permute + avg_pool2d), linear.
    gathered = jnp.take(emb_table, x_tokens, axis=0)          # (S, B, E)
    ref = jnp.mean(gathered, axis=0) @ fc_w.T + fc_b          # (B, O)

    assert out.shape == (batch, output_dim)
    assert jnp.allclose(out, ref, atol=1e-4, rtol=1e-4), float(
        jnp.max(jnp.abs(out - ref)))

    print("KERNEL_OK")
</pallas_src>

<mosaic_0001>
module attributes {stable_mosaic.version = 11 : i64} {
  func.func @fasttext_kernel(%arg0: i32, %arg1: memref<8x16xi32, #tpu.memory_space<vmem>>, %arg2: memref<128x128xf32, #tpu.memory_space<vmem>>, %arg3: memref<128x128xf32, #tpu.memory_space<vmem>>, %arg4: memref<1x128xf32, #tpu.memory_space<vmem>>, %arg5: memref<8x128xf32, #tpu.memory_space<vmem>>) attributes {dimension_semantics = [#tpu.dimension_semantics<parallel>], iteration_bounds = array<i64: 2>, scalar_prefetch = 0 : i64, scratch_operands = 0 : i64, tpu.core_type = #tpu.core_type<tc>, window_params = [{transform_indices = @transform_0, window_bounds = array<i64: 8, 16>}, {pipeline_mode = #tpu.pipeline_mode<synchronous>, transform_indices = @transform_1, window_bounds = array<i64: 128, 128>}, {pipeline_mode = #tpu.pipeline_mode<synchronous>, transform_indices = @transform_2, window_bounds = array<i64: 128, 128>}, {pipeline_mode = #tpu.pipeline_mode<synchronous>, transform_indices = @transform_3, window_bounds = array<i64: 1, 128>}, {transform_indices = @transform_4, window_bounds = array<i64: 8, 128>}]} {
    %c0 = arith.constant 0 : index
    %c0_0 = arith.constant 0 : index
    %0 = vector.load %arg1[%c0, %c0_0] : memref<8x16xi32, #tpu.memory_space<vmem>>, vector<8x16xi32>
    %1 = tpu.iota {dimensions = array<i32: 1>} : vector<8x128xi32>
    %cst = arith.constant 0.000000e+00 : f32
    %2 = vector.broadcast %cst : f32 to vector<8x128xf32>
    %3 = vector.extract_strided_slice %0 {offsets = [0, 0], sizes = [8, 1], strides = [1, 1]} : vector<8x16xi32> to vector<8x1xi32>
    %4 = vector.broadcast %3 : vector<8x1xi32> to vector<8x128xi32>
    %5 = arith.cmpi eq, %4, %1 : vector<8x128xi32>
    %6 = arith.extui %5 : vector<8x128xi1> to vector<8x128xi32>
    %7 = arith.sitofp %6 : vector<8x128xi32> to vector<8x128xf32>
    %8 = arith.addf %2, %7 : vector<8x128xf32>
    %9 = vector.extract_strided_slice %0 {offsets = [0, 1], sizes = [8, 1], strides = [1, 1]} : vector<8x16xi32> to vector<8x1xi32>
    %10 = vector.broadcast %9 : vector<8x1xi32> to vector<8x128xi32>
    %11 = arith.cmpi eq, %10, %1 : vector<8x128xi32>
    %12 = arith.extui %11 : vector<8x128xi1> to vector<8x128xi32>
    %13 = arith.sitofp %12 : vector<8x128xi32> to vector<8x128xf32>
    %14 = arith.addf %8, %13 : vector<8x128xf32>
    %15 = vector.extract_strided_slice %0 {offsets = [0, 2], sizes = [8, 1], strides = [1, 1]} : vector<8x16xi32> to vector<8x1xi32>
    %16 = vector.broadcast %15 : vector<8x1xi32> to vector<8x128xi32>
    %17 = arith.cmpi eq, %16, %1 : vector<8x128xi32>
    %18 = arith.extui %17 : vector<8x128xi1> to vector<8x128xi32>
    %19 = arith.sitofp %18 : vector<8x128xi32> to vector<8x128xf32>
    %20 = arith.addf %14, %19 : vector<8x128xf32>
    %21 = vector.extract_strided_slice %0 {offsets = [0, 3], sizes = [8, 1], strides = [1, 1]} : vector<8x16xi32> to vector<8x1xi32>
    %22 = vector.broadcast %21 : vector<8x1xi32> to vector<8x128xi32>
    %23 = arith.cmpi eq, %22, %1 : vector<8x128xi32>
    %24 = arith.extui %23 : vector<8x128xi1> to vector<8x128xi32>
    %25 = arith.sitofp %24 : vector<8x128xi32> to vector<8x128xf32>
    %26 = arith.addf %20, %25 : vector<8x128xf32>
    %27 = vector.extract_strided_slice %0 {offsets = [0, 4], sizes = [8, 1], strides = [1, 1]} : vector<8x16xi32> to vector<8x1xi32>
    %28 = vector.broadcast %27 : vector<8x1xi32> to vector<8x128xi32>
    %29 = arith.cmpi eq, %28, %1 : vector<8x128xi32>
    %30 = arith.extui %29 : vector<8x128xi1> to vector<8x128xi32>
    %31 = arith.sitofp %30 : vector<8x128xi32> to vector<8x128xf32>
    %32 = arith.addf %26, %31 : vector<8x128xf32>
    %33 = vector.extract_strided_slice %0 {offsets = [0, 5], sizes = [8, 1], strides = [1, 1]} : vector<8x16xi32> to vector<8x1xi32>
    %34 = vector.broadcast %33 : vector<8x1xi32> to vector<8x128xi32>
    %35 = arith.cmpi eq, %34, %1 : vector<8x128xi32>
    %36 = arith.extui %35 : vector<8x128xi1> to vector<8x128xi32>
    %37 = arith.sitofp %36 : vector<8x128xi32> to vector<8x128xf32>
    %38 = arith.addf %32, %37 : vector<8x128xf32>
    %39 = vector.extract_strided_slice %0 {offsets = [0, 6], sizes = [8, 1], strides = [1, 1]} : vector<8x16xi32> to vector<8x1xi32>
    %40 = vector.broadcast %39 : vector<8x1xi32> to vector<8x128xi32>
    %41 = arith.cmpi eq, %40, %1 : vector<8x128xi32>
    %42 = arith.extui %41 : vector<8x128xi1> to vector<8x128xi32>
    %43 = arith.sitofp %42 : vector<8x128xi32> to vector<8x128xf32>
    %44 = arith.addf %38, %43 : vector<8x128xf32>
    %45 = vector.extract_strided_slice %0 {offsets = [0, 7], sizes = [8, 1], strides = [1, 1]} : vector<8x16xi32> to vector<8x1xi32>
    %46 = vector.broadcast %45 : vector<8x1xi32> to vector<8x128xi32>
    %47 = arith.cmpi eq, %46, %1 : vector<8x128xi32>
    %48 = arith.extui %47 : vector<8x128xi1> to vector<8x128xi32>
    %49 = arith.sitofp %48 : vector<8x128xi32> to vector<8x128xf32>
    %50 = arith.addf %44, %49 : vector<8x128xf32>
    %51 = vector.extract_strided_slice %0 {offsets = [0, 8], sizes = [8, 1], strides = [1, 1]} : vector<8x16xi32> to vector<8x1xi32>
    %52 = vector.broadcast %51 : vector<8x1xi32> to vector<8x128xi32>
    %53 = arith.cmpi eq, %52, %1 : vector<8x128xi32>
    %54 = arith.extui %53 : vector<8x128xi1> to vector<8x128xi32>
    %55 = arith.sitofp %54 : vector<8x128xi32> to vector<8x128xf32>
    %56 = arith.addf %50, %55 : vector<8x128xf32>
    %57 = vector.extract_strided_slice %0 {offsets = [0, 9], sizes = [8, 1], strides = [1, 1]} : vector<8x16xi32> to vector<8x1xi32>
    %58 = vector.broadcast %57 : vector<8x1xi32> to vector<8x128xi32>
    %59 = arith.cmpi eq, %58, %1 : vector<8x128xi32>
    %60 = arith.extui %59 : vector<8x128xi1> to vector<8x128xi32>
    %61 = arith.sitofp %60 : vector<8x128xi32> to vector<8x128xf32>
    %62 = arith.addf %56, %61 : vector<8x128xf32>
    %63 = vector.extract_strided_slice %0 {offsets = [0, 10], sizes = [8, 1], strides = [1, 1]} : vector<8x16xi32> to vector<8x1xi32>
    %64 = vector.broadcast %63 : vector<8x1xi32> to vector<8x128xi32>
    %65 = arith.cmpi eq, %64, %1 : vector<8x128xi32>
    %66 = arith.extui %65 : vector<8x128xi1> to vector<8x128xi32>
    %67 = arith.sitofp %66 : vector<8x128xi32> to vector<8x128xf32>
    %68 = arith.addf %62, %67 : vector<8x128xf32>
    %69 = vector.extract_strided_slice %0 {offsets = [0, 11], sizes = [8, 1], strides = [1, 1]} : vector<8x16xi32> to vector<8x1xi32>
    %70 = vector.broadcast %69 : vector<8x1xi32> to vector<8x128xi32>
    %71 = arith.cmpi eq, %70, %1 : vector<8x128xi32>
    %72 = arith.extui %71 : vector<8x128xi1> to vector<8x128xi32>
    %73 = arith.sitofp %72 : vector<8x128xi32> to vector<8x128xf32>
    %74 = arith.addf %68, %73 : vector<8x128xf32>
    %75 = vector.extract_strided_slice %0 {offsets = [0, 12], sizes = [8, 1], strides = [1, 1]} : vector<8x16xi32> to vector<8x1xi32>
    %76 = vector.broadcast %75 : vector<8x1xi32> to vector<8x128xi32>
    %77 = arith.cmpi eq, %76, %1 : vector<8x128xi32>
    %78 = arith.extui %77 : vector<8x128xi1> to vector<8x128xi32>
    %79 = arith.sitofp %78 : vector<8x128xi32> to vector<8x128xf32>
    %80 = arith.addf %74, %79 : vector<8x128xf32>
    %81 = vector.extract_strided_slice %0 {offsets = [0, 13], sizes = [8, 1], strides = [1, 1]} : vector<8x16xi32> to vector<8x1xi32>
    %82 = vector.broadcast %81 : vector<8x1xi32> to vector<8x128xi32>
    %83 = arith.cmpi eq, %82, %1 : vector<8x128xi32>
    %84 = arith.extui %83 : vector<8x128xi1> to vector<8x128xi32>
    %85 = arith.sitofp %84 : vector<8x128xi32> to vector<8x128xf32>
    %86 = arith.addf %80, %85 : vector<8x128xf32>
    %87 = vector.extract_strided_slice %0 {offsets = [0, 14], sizes = [8, 1], strides = [1, 1]} : vector<8x16xi32> to vector<8x1xi32>
    %88 = vector.broadcast %87 : vector<8x1xi32> to vector<8x128xi32>
    %89 = arith.cmpi eq, %88, %1 : vector<8x128xi32>
    %90 = arith.extui %89 : vector<8x128xi1> to vector<8x128xi32>
    %91 = arith.sitofp %90 : vector<8x128xi32> to vector<8x128xf32>
    %92 = arith.addf %86, %91 : vector<8x128xf32>
    %93 = vector.extract_strided_slice %0 {offsets = [0, 15], sizes = [8, 1], strides = [1, 1]} : vector<8x16xi32> to vector<8x1xi32>
    %94 = vector.broadcast %93 : vector<8x1xi32> to vector<8x128xi32>
    %95 = arith.cmpi eq, %94, %1 : vector<8x128xi32>
    %96 = arith.extui %95 : vector<8x128xi1> to vector<8x128xi32>
    %97 = arith.sitofp %96 : vector<8x128xi32> to vector<8x128xf32>
    %98 = arith.addf %92, %97 : vector<8x128xf32>
    %c0_1 = arith.constant 0 : index
    %c0_2 = arith.constant 0 : index
    %99 = vector.load %arg2[%c0_1, %c0_2] : memref<128x128xf32, #tpu.memory_space<vmem>>, vector<128x128xf32>
    %cst_3 = arith.constant dense<0.000000e+00> : vector<8x128xf32>
    %100 = tpu.matmul %98, %99, %cst_3 {dimension_numbers = #tpu.dot_dimension_numbers<[1], [0], [0], [1], [0, 0, 1, 1], [], []>} : vector<8x128xf32>, vector<128x128xf32>, vector<8x128xf32> -> vector<8x128xf32>
    %c0_4 = arith.constant 0 : index
    %c0_5 = arith.constant 0 : index
    %101 = vector.load %arg3[%c0_4, %c0_5] : memref<128x128xf32, #tpu.memory_space<vmem>>, vector<128x128xf32>
    %cst_6 = arith.constant dense<0.000000e+00> : vector<8x128xf32>
    %102 = tpu.matmul %100, %101, %cst_6 {dimension_numbers = #tpu.dot_dimension_numbers<[1], [0], [0], [1], [0, 0, 1, 1], [], []>} : vector<8x128xf32>, vector<128x128xf32>, vector<8x128xf32> -> vector<8x128xf32>
    %c0_7 = arith.constant 0 : index
    %c0_8 = arith.constant 0 : index
    %103 = vector.load %arg4[%c0_7, %c0_8] : memref<1x128xf32, #tpu.memory_space<vmem>>, vector<1x128xf32>
    %104 = vector.broadcast %103 : vector<1x128xf32> to vector<8x128xf32>
    %105 = arith.addf %102, %104 : vector<8x128xf32>
    %c0_9 = arith.constant 0 : index
    %c0_10 = arith.constant 0 : index
    %106 = vector.load %arg5[%c0_9, %c0_10] : memref<8x128xf32, #tpu.memory_space<vmem>>, vector<8x128xf32>
    tpu.vector_store %arg5[%c0_9, %c0_10], %105 {strides = array<i32>} : memref<8x128xf32, #tpu.memory_space<vmem>>, vector<8x128xf32>,
    return
  }
  func.func @transform_0(%arg0: i32) -> (i32, i32) {
    %c0_i32 = arith.constant 0 : i32
    %c0_i32_0 = arith.constant 0 : i32
    return %arg0, %c0_i32 : i32, i32
  }
  func.func @transform_1(%arg0: i32) -> (i32, i32) {
    %c0_i32 = arith.constant 0 : i32
    %c0_i32_0 = arith.constant 0 : i32
    %c0_i32_1 = arith.constant 0 : i32
    return %c0_i32, %c0_i32_0 : i32, i32
  }
  func.func @transform_2(%arg0: i32) -> (i32, i32) {
    %c0_i32 = arith.constant 0 : i32
    %c0_i32_0 = arith.constant 0 : i32
    %c0_i32_1 = arith.constant 0 : i32
    return %c0_i32, %c0_i32_0 : i32, i32
  }
  func.func @transform_3(%arg0: i32) -> (i32, i32) {
    %c0_i32 = arith.constant 0 : i32
    %c0_i32_0 = arith.constant 0 : i32
    %c0_i32_1 = arith.constant 0 : i32
    return %c0_i32, %c0_i32_0 : i32, i32
  }
  func.func @transform_4(%arg0: i32) -> (i32, i32) {
    %c0_i32 = arith.constant 0 : i32
    %c0_i32_0 = arith.constant 0 : i32
    return %arg0, %c0_i32 : i32, i32
  }
}

</mosaic_0001>

<llo_original>
// kernel: tpu_custom_call.1
$region0: #{tpu_custom_call.1}
  #allocation0 [shape = 'u32[]', space=smem, size = 0x4, offset = 0x4, fixed_abs, tag = 'smem constant byte address 0x4 - core index']
  #allocation1 [shape = 'u32[144,128]{1,0:T(1,128)}', space=vmem, size = 0x12000, scoped, tag = 'internal scratch']
  %s0 = inlined_call_operand.hbm [shape: s32[16,16], index: 0, kind: input, shape index: {}]
  %s1 = inlined_call_operand.hbm [shape: f32[128,128], index: 1, kind: input, shape index: {}]
  %s2 = inlined_call_operand.hbm [shape: f32[128,128], index: 2, kind: input, shape index: {}]
  %s3 = inlined_call_operand.vmem [shape: f32[1,128], index: 3, kind: input, shape index: {}]
  %s4 = inlined_call_operand.hbm [shape: f32[16,128], index: 4, kind: output, shape index: {}]
  %s5 = sld [smem:[#allocation0]]
  $region61: #{tpu_custom_call.1} parent=0
    _
  %s7 = ssub.s32 1, %s5
  %s8 = scalar_select 0, %s7, %s5
  $region1: #{tpu_custom_call.1} parent=0
    #allocation2 [shape = 'u8[8192]{0}', space=vmem, size = 0x2000, scoped, tag = 'input window, operand 0']
    #allocation3 [shape = 's32[2]{0}', space=sflag, size = 0x8, scoped, tag = 'scoped memory for tpu_custom_call.1']
    #allocation4 [shape = 's32[2]{0}', space=sflag, size = 0x8, scoped, tag = 'scoped memory for tpu_custom_call.1']
    #allocation5 [shape = 'u8[65536]{0}', space=vmem, size = 0x10000, scoped, tag = 'input window, operand 1, single buffered']
    #allocation6 [shape = 's32[1]{0}', space=sflag, size = 0x4, scoped, tag = 'scoped memory for tpu_custom_call.1']
    #allocation7 [shape = 'u8[65536]{0}', space=vmem, size = 0x10000, scoped, tag = 'input window, operand 2, single buffered']
    #allocation8 [shape = 'u8[8192]{0}', space=vmem, size = 0x2000, scoped, tag = 'output window, operand 0']
    %9 = vsyncpa [#allocation3], 0
    %s10 = scalar_lea.sflag [#allocation3], 1
    %11 = vsyncpa %s10, 0
    %12 = vsyncpa [#allocation6], 0
    %13 = vsyncpa [#allocation4], 0
    %s14 = scalar_lea.sflag [#allocation4], 1
    %15 = vsyncpa %s14, 0
    loop: start=0, step=1, limit=4
    $region2: #{tpu_custom_call.1} parent=1 // loop_pre_header
      _
    $region3: #{tpu_custom_call.1} parent=1 // loop_header
      %s17 = sphi 0, %s21
      %p18 = scmp.ge.s32.totalorder %s17, 4
      %s27 = sphi 0, %s29
      %s30 = sphi 0, %s27
      %s31 = sphi 0, %s30
      %s47 = sphi 0, %s31
      %s51 = sphi 0, %s51
      %s53 = sphi 0, %s51
      %s54 = sphi 0, %s53
      %s68 = sphi 0, %s54
      %s72 = sphi 0, %s72
      %s74 = sphi 0, %s72
      %s75 = sphi 0, %s74
      %s89 = sphi 0, %s75
      %s93 = sphi 0, %s93
      %s95 = sphi 0, %s93
      %s96 = sphi 0, %s95
      %s110 = sphi 0, %s96
      %s116 = sphi 0, %s118
      %s119 = sphi 0, %s116
      %s120 = sphi 0, %s119
      %s136 = sphi 0, %s120
    $region4: #{tpu_custom_call.1} parent=1 // loop_header_branch
      %20 = sbr.rel (%p18) target = $region8
    $region5: #{tpu_custom_call.1} parent=1 // loop_body
      %s22 = ssub.s32 %s17, 1
      %s23 = ssub.s32 %s17, 2
      %s24 = sadd.s32 %s17, 1
      %s25 = ssub.s32 %s17, %s24
      %p26 = scmp.eq.s32.totalorder %s25, 0
      %s28 = sadd.s32 %s27, 1
      %s29 = scalar_select %p26, %s27, %s28
      %p32 = pneg %p26
      %p33 = scmp.eq.s32.totalorder %s17, 1
      %p34 = por %p32, %p33
      %p35 = scmp.ne.s32.totalorder %s27, %s30
      %p36 = scmp.eq.s32.totalorder %s17, 0
      %p37 = por %p35, %p36
      %p38 = scmp.ne.s32.totalorder %s27, %s30
      %p39 = scmp.eq.s32.totalorder %s22, 1
      %p40 = por %p38, %p39
      %p41 = scmp.ne.s32.totalorder %s30, %s31
      %p42 = scmp.eq.s32.totalorder %s22, 0
      %p43 = por %p41, %p42
      %p44 = scmp.ne.s32.totalorder %s30, %s31
      %p45 = scmp.eq.s32.totalorder %s23, 1
      %p46 = por %p44, %p45
      %p48 = scmp.ne.s32.totalorder %s31, %s47
      %p49 = scmp.eq.s32.totalorder %s23, 0
      %p50 = por %p48, %p49
      %s52 = sadd.s32 %s51, 1
      %p55 = scmp.eq.s32.totalorder %s17, 1
      %p56 = scmp.ne.s32.totalorder %s51, %s53
      %p57 = scmp.eq.s32.totalorder %s17, 0
      %p58 = por %p56, %p57
      %p59 = scmp.ne.s32.totalorder %s51, %s53
      %p60 = scmp.eq.s32.totalorder %s22, 1
      %p61 = por %p59, %p60
      %p62 = scmp.ne.s32.totalorder %s53, %s54
      %p63 = scmp.eq.s32.totalorder %s22, 0
      %p64 = por %p62, %p63
      %p65 = scmp.ne.s32.totalorder %s53, %s54
      %p66 = scmp.eq.s32.totalorder %s23, 1
      %p67 = por %p65, %p66
      %p69 = scmp.ne.s32.totalorder %s54, %s68
      %p70 = scmp.eq.s32.totalorder %s23, 0
      %p71 = por %p69, %p70
      %s73 = sadd.s32 %s72, 1
      %p76 = scmp.eq.s32.totalorder %s17, 1
      %p77 = scmp.ne.s32.totalorder %s72, %s74
      %p78 = scmp.eq.s32.totalorder %s17, 0
      %p79 = por %p77, %p78
      %p80 = scmp.ne.s32.totalorder %s72, %s74
      %p81 = scmp.eq.s32.totalorder %s22, 1
      %p82 = por %p80, %p81
      %p83 = scmp.ne.s32.totalorder %s74, %s75
      %p84 = scmp.eq.s32.totalorder %s22, 0
      %p85 = por %p83, %p84
      %p86 = scmp.ne.s32.totalorder %s74, %s75
      %p87 = scmp.eq.s32.totalorder %s23, 1
      %p88 = por %p86, %p87
      %p90 = scmp.ne.s32.totalorder %s75, %s89
      %p91 = scmp.eq.s32.totalorder %s23, 0
      %p92 = por %p90, %p91
      %s94 = sadd.s32 %s93, 1
      %p97 = scmp.eq.s32.totalorder %s17, 1
      %p98 = scmp.ne.s32.totalorder %s93, %s95
      %p99 = scmp.eq.s32.totalorder %s17, 0
      %p100 = por %p98, %p99
      %p101 = scmp.ne.s32.totalorder %s93, %s95
      %p102 = scmp.eq.s32.totalorder %s22, 1
      %p103 = por %p101, %p102
      %p104 = scmp.ne.s32.totalorder %s95, %s96
      %p105 = scmp.eq.s32.totalorder %s22, 0
      %p106 = por %p104, %p105
      %p107 = scmp.ne.s32.totalorder %s95, %s96
      %p108 = scmp.eq.s32.totalorder %s23, 1
      %p109 = por %p107, %p108
      %p111 = scmp.ne.s32.totalorder %s96, %s110
      %p112 = scmp.eq.s32.totalorder %s23, 0
      %p113 = por %p111, %p112
      %s114 = ssub.s32 %s17, %s24
      %p115 = scmp.eq.s32.totalorder %s114, 0
      %s117 = sadd.s32 %s116, 1
      %s118 = scalar_select %p115, %s116, %s117
      %p121 = pneg %p115
      %p122 = scmp.eq.s32.totalorder %s17, 1
      %p123 = por %p121, %p122
      %p124 = scmp.ne.s32.totalorder %s116, %s119
      %p125 = scmp.eq.s32.totalorder %s17, 0
      %p126 = por %p124, %p125
      %p127 = scmp.ne.s32.totalorder %s116, %s119
      %p128 = scmp.eq.s32.totalorder %s22, 1
      %p129 = por %p127, %p128
      %p130 = scmp.ne.s32.totalorder %s119, %s120
      %p131 = scmp.eq.s32.totalorder %s22, 0
      %p132 = por %p130, %p131
      %p133 = scmp.ne.s32.totalorder %s119, %s120
      %p134 = scmp.eq.s32.totalorder %s23, 1
      %p135 = por %p133, %p134
      %p137 = scmp.ne.s32.totalorder %s120, %s136
      %p138 = scmp.eq.s32.totalorder %s23, 0
      %p139 = por %p137, %p138
      %p140 = scmp.le.s32.totalorder 1, %s17
      %p141 = scmp.lt.s32.totalorder %s17, 3
      %p142 = pnand %p140, %p141
      %p143 = pneg %p142
      // Predicated region
      $region9: #{tpu_custom_call.1} parent=5 // pred_check
        _
      $region10: #{tpu_custom_call.1} parent=5 // pred_check_branch
        %145 = sbr.rel (%p142) target = $region12
      $region11: #{tpu_custom_call.1} parent=5 // pred_region
        %s146 = ssub.s32 %s17, 1
        // Predicated region
        $region13: #{tpu_custom_call.1} parent=11 // pred_check
          %p147 = pneg %p64
        $region14: #{tpu_custom_call.1} parent=11 // pred_check_branch
          %149 = sbr.rel (%p147) target = $region16
        $region15: #{tpu_custom_call.1} parent=11 // pred_region
          %s151 = ssub.s32 2048, 2048
          %152 = vsyncadd [#allocation6], %s151
          %s153 = sshll.u32 [#allocation5], 4
          %s154 = int_to_ptr.vmem [resolvable:$true] %s153
          %159 = dma.hbm_to_vmem [thread:$0]  %s1, 2048, %s154, [#allocation6], 128, 128, 8
        $region16: #{tpu_custom_call.1} parent=11 // pred_fallthru
          _
        // Predicated region
        $region17: #{tpu_custom_call.1} parent=11 // pred_check
          %p160 = pneg %p85
        $region18: #{tpu_custom_call.1} parent=11 // pred_check_branch
          %162 = sbr.rel (%p160) target = $region20
        $region19: #{tpu_custom_call.1} parent=11 // pred_region
          %s164 = ssub.s32 2048, 2048
          %165 = vsyncadd [#allocation6], %s164
          %s166 = sshll.u32 [#allocation7], 4
          %s167 = int_to_ptr.vmem [resolvable:$true] %s166
          %172 = dma.hbm_to_vmem [thread:$0]  %s2, 2048, %s167, [#allocation6], 128, 128, 8
        $region20: #{tpu_custom_call.1} parent=11 // pred_fallthru
          _
        // Predicated region
        $region21: #{tpu_custom_call.1} parent=11 // pred_check
          %p173 = pneg %p106
        $region22: #{tpu_custom_call.1} parent=11 // pred_check_branch
          %175 = sbr.rel (%p173) target = $region24
        $region23: #{tpu_custom_call.1} parent=11 // pred_region
          _
        $region24: #{tpu_custom_call.1} parent=11 // pred_fallthru
          _
      $region12: #{tpu_custom_call.1} parent=5 // pred_fallthru
        _
      %p176 = scmp.lt.s32.totalorder %s17, 2
      // Predicated region
      $region25: #{tpu_custom_call.1} parent=5 // pred_check
        %p177 = pneg %p176
      $region26: #{tpu_custom_call.1} parent=5 // pred_check_branch
        %179 = sbr.rel (%p177) target = $region28
      $region27: #{tpu_custom_call.1} parent=5 // pred_region
        // Predicated region
        $region29: #{tpu_custom_call.1} parent=27 // pred_check
          %p180 = pneg %p37
        $region30: #{tpu_custom_call.1} parent=27 // pred_check_branch
          %182 = sbr.rel (%p180) target = $region32
        $region31: #{tpu_custom_call.1} parent=27 // pred_region
          %s183 = sand.u32 %s27, 1
          %s184 = scalar_lea.sflag [#allocation3], %s183
          %s185 = sand.u32 %s27, 1
          %s186 = smul.addr %s185, 8
          %s187 = scalar_lea.vmem [#allocation2], %s186
          %s189 = ssub.s32 128, 128
          %190 = vsyncadd %s184, %s189
          %s191 = smul.addr %s17, 128
          %s192 = scalar_lea.hbm %s0, %s191
          %s194 = sshll.u32 %s187, 4
          %s195 = int_to_ptr.vmem [resolvable:$true] %s194
          %197 = dma.hbm_to_vmem [thread:$0]  %s192, 128, %s195, %s184
        $region32: #{tpu_custom_call.1} parent=27 // pred_fallthru
          _
      $region28: #{tpu_custom_call.1} parent=5 // pred_fallthru
        _
      %p198 = scmp.le.s32.totalorder 1, %s17
      %p199 = scmp.lt.s32.totalorder %s17, 3
      %p200 = pnand %p198, %p199
      %p201 = pneg %p200
      // Predicated region
      $region33: #{tpu_custom_call.1} parent=5 // pred_check
        _
      $region34: #{tpu_custom_call.1} parent=5 // pred_check_branch
        %203 = sbr.rel (%p200) target = $region36
      $region35: #{tpu_custom_call.1} parent=5 // pred_region
        %s204 = ssub.s32 %s17, 1
        %s205 = sand.u32 %s30, 1
        %s206 = scalar_lea.sflag [#allocation3], %s205
        %s207 = sand.u32 %s30, 1
        %s208 = smul.addr %s207, 8
        %s209 = scalar_lea.vmem [#allocation2], %s208
        // Predicated region
        $region37: #{tpu_custom_call.1} parent=35 // pred_check
          %p210 = pneg %p43
        $region38: #{tpu_custom_call.1} parent=35 // pred_check_branch
          %212 = sbr.rel (%p210) target = $region40
        $region39: #{tpu_custom_call.1} parent=35 // pred_region
          %213 = dma.done %s206, 128
        $region40: #{tpu_custom_call.1} parent=35 // pred_fallthru
          _
        // Predicated region
        $region41: #{tpu_custom_call.1} parent=35 // pred_check
          %p214 = pneg %p64
        $region42: #{tpu_custom_call.1} parent=35 // pred_check_branch
          %216 = sbr.rel (%p214) target = $region44
        $region43: #{tpu_custom_call.1} parent=35 // pred_region
          %217 = dma.done [#allocation6], 2048
        $region44: #{tpu_custom_call.1} parent=35 // pred_fallthru
          _
        // Predicated region
        $region45: #{tpu_custom_call.1} parent=35 // pred_check
          %p218 = pneg %p85
        $region46: #{tpu_custom_call.1} parent=35 // pred_check_branch
          %220 = sbr.rel (%p218) target = $region48
        $region47: #{tpu_custom_call.1} parent=35 // pred_region
          %221 = dma.done [#allocation6], 2048
        $region48: #{tpu_custom_call.1} parent=35 // pred_fallthru
          _
        %s222 = sand.u32 %s30, 1
        %s223 = scalar_lea.sflag [#allocation3], %s222
        %s224 = sand.u32 %s30, 1
        %s225 = smul.addr %s224, 8
        %s226 = scalar_lea.vmem [#allocation2], %s225
        %p227 = pneg %p43
        %p228 = pneg %p40
        %p229 = pneg %p64
        %p230 = pneg %p61
        %p231 = pneg %p85
        %p232 = pneg %p82
        %p233 = pneg %p106
        %p234 = pneg %p103
        %p235 = pneg %p132
        %p236 = pneg %p129
        %s237 = sand.u32 %s119, 1
        %s238 = scalar_lea.sflag [#allocation4], %s237
        %s239 = sand.u32 %s119, 1
        %s240 = smul.addr %s239, 8
        %s241 = scalar_lea.vmem [#allocation8], %s240
        %v242 = vld [vmem:[%s209] sm:$0xff]
        %v243 = vlaneseq
        %v244 = vand.u32 %v243, 127
        %245 = vset.pattern.permute.xlu0 0
        %246 = vperm.xlu0 %245, %v242
        %v247 = vpop.permute.xlu0 %246
        %vm248 = vcmp.eq.s32.totalorder %v247, %v244
        %v249 = vsel %vm248, 1, 0
        %v250 = vcvt.s32.f32 %v249
        %v251 = vadd.f32 %v250, 0.0
        %252 = vset.pattern.permute.xlu0 1
        %253 = vperm.xlu0 %252, %v242
        %v254 = vpop.permute.xlu0 %253
        %vm255 = vcmp.eq.s32.totalorder %v254, %v244
        %v256 = vsel %vm255, 1, 0
        %v257 = vcvt.s32.f32 %v256
        %v258 = vadd.f32 %v251, %v257
        %259 = vset.pattern.permute.xlu0 2
        %260 = vperm.xlu0 %259, %v242
        %v261 = vpop.permute.xlu0 %260
        %vm262 = vcmp.eq.s32.totalorder %v261, %v244
        %v263 = vsel %vm262, 1, 0
        %v264 = vcvt.s32.f32 %v263
        %v265 = vadd.f32 %v258, %v264
        %266 = vset.pattern.permute.xlu0 3
        %267 = vperm.xlu0 %266, %v242
        %v268 = vpop.permute.xlu0 %267
        %vm269 = vcmp.eq.s32.totalorder %v268, %v244
        %v270 = vsel %vm269, 1, 0
        %v271 = vcvt.s32.f32 %v270
        %v272 = vadd.f32 %v265, %v271
        %273 = vset.pattern.permute.xlu0 4
        %274 = vperm.xlu0 %273, %v242
        %v275 = vpop.permute.xlu0 %274
        %vm276 = vcmp.eq.s32.totalorder %v275, %v244
        %v277 = vsel %vm276, 1, 0
        %v278 = vcvt.s32.f32 %v277
        %v279 = vadd.f32 %v272, %v278
        %280 = vset.pattern.permute.xlu0 5
        %281 = vperm.xlu0 %280, %v242
        %v282 = vpop.permute.xlu0 %281
        %vm283 = vcmp.eq.s32.totalorder %v282, %v244
        %v284 = vsel %vm283, 1, 0
        %v285 = vcvt.s32.f32 %v284
        %v286 = vadd.f32 %v279, %v285
        %287 = vset.pattern.permute.xlu0 6
        %288 = vperm.xlu0 %287, %v242
        %v289 = vpop.permute.xlu0 %288
        %vm290 = vcmp.eq.s32.totalorder %v289, %v244
        %v291 = vsel %vm290, 1, 0
        %v292 = vcvt.s32.f32 %v291
        %v293 = vadd.f32 %v286, %v292
        %294 = vset.pattern.permute.xlu0 7
        %295 = vperm.xlu0 %294, %v242
        %v296 = vpop.permute.xlu0 %295
        %vm297 = vcmp.eq.s32.totalorder %v296, %v244
        %v298 = vsel %vm297, 1, 0
        %v299 = vcvt.s32.f32 %v298
        %v300 = vadd.f32 %v293, %v299
        %301 = vset.pattern.permute.xlu0 8
        %302 = vperm.xlu0 %301, %v242
        %v303 = vpop.permute.xlu0 %302
        %vm304 = vcmp.eq.s32.totalorder %v303, %v244
        %v305 = vsel %vm304, 1, 0
        %v306 = vcvt.s32.f32 %v305
        %v307 = vadd.f32 %v300, %v306
        %308 = vset.pattern.permute.xlu0 9
        %309 = vperm.xlu0 %308, %v242
        %v310 = vpop.permute.xlu0 %309
        %vm311 = vcmp.eq.s32.totalorder %v310, %v244
        %v312 = vsel %vm311, 1, 0
        %v313 = vcvt.s32.f32 %v312
        %v314 = vadd.f32 %v307, %v313
        %315 = vset.pattern.permute.xlu0 10
        %316 = vperm.xlu0 %315, %v242
        %v317 = vpop.permute.xlu0 %316
        %vm318 = vcmp.eq.s32.totalorder %v317, %v244
        %v319 = vsel %vm318, 1, 0
        %v320 = vcvt.s32.f32 %v319
        %v321 = vadd.f32 %v314, %v320
        %322 = vset.pattern.permute.xlu0 11
        %323 = vperm.xlu0 %322, %v242
        %v324 = vpop.permute.xlu0 %323
        %vm325 = vcmp.eq.s32.totalorder %v324, %v244
        %v326 = vsel %vm325, 1, 0
        %v327 = vcvt.s32.f32 %v326
        %v328 = vadd.f32 %v321, %v327
        %329 = vset.pattern.permute.xlu0 12
        %330 = vperm.xlu0 %329, %v242
        %v331 = vpop.permute.xlu0 %330
        %vm332 = vcmp.eq.s32.totalorder %v331, %v244
        %v333 = vsel %vm332, 1, 0
        %v334 = vcvt.s32.f32 %v333
        %v335 = vadd.f32 %v328, %v334
        %336 = vset.pattern.permute.xlu0 13
        %337 = vperm.xlu0 %336, %v242
        %v338 = vpop.permute.xlu0 %337
        %vm339 = vcmp.eq.s32.totalorder %v338, %v244
        %v340 = vsel %vm339, 1, 0
        %v341 = vcvt.s32.f32 %v340
        %v342 = vadd.f32 %v335, %v341
        %343 = vset.pattern.permute.xlu0 14
        %344 = vperm.xlu0 %343, %v242
        %v345 = vpop.permute.xlu0 %344
        %vm346 = vcmp.eq.s32.totalorder %v345, %v244
        %v347 = vsel %vm346, 1, 0
        %v348 = vcvt.s32.f32 %v347
        %v349 = vadd.f32 %v342, %v348
        %350 = vset.pattern.permute.xlu0 15
        %351 = vperm.xlu0 %350, %v242
        %v352 = vpop.permute.xlu0 %351
        %vm353 = vcmp.eq.s32.totalorder %v352, %v244
        %v354 = vsel %vm353, 1, 0
        %v355 = vcvt.s32.f32 %v354
        %v356 = vadd.f32 %v349, %v355
        %v357 = vld [vmem:[#allocation5] sm:$0xff]
        %v358 = vld [vmem:[#allocation5 + $0x8] sm:$0xff]
        %v359 = vld [vmem:[#allocation5 + $0x10] sm:$0xff]
        %v360 = vld [vmem:[#allocation5 + $0x18] sm:$0xff]
        %v361 = vld [vmem:[#allocation5 + $0x20] sm:$0xff]
        %v362 = vld [vmem:[#allocation5 + $0x28] sm:$0xff]
        %v363 = vld [vmem:[#allocation5 + $0x30] sm:$0xff]
        %v364 = vld [vmem:[#allocation5 + $0x38] sm:$0xff]
        %v365 = vld [vmem:[#allocation5 + $0x40] sm:$0xff]
        %v366 = vld [vmem:[#allocation5 + $0x48] sm:$0xff]
        %v367 = vld [vmem:[#allocation5 + $0x50] sm:$0xff]
        %v368 = vld [vmem:[#allocation5 + $0x58] sm:$0xff]
        %v369 = vld [vmem:[#allocation5 + $0x60] sm:$0xff]
        %v370 = vld [vmem:[#allocation5 + $0x68] sm:$0xff]
        %v371 = vld [vmem:[#allocation5 + $0x70] sm:$0xff]
        %v372 = vld [vmem:[#allocation5 + $0x78] sm:$0xff]
        %373 = vmatprep.subr.mxu0 0.0
        %374 = vmatpush1.msra.mxu0 %v357
        %375 = vmatprep.subr.mxu0 0.0
        %376 = vmatpush1.msra.mxu0 %v358
        %377 = vmatprep.subr.mxu0 0.0
        %378 = vmatpush1.msra.mxu0 %v359
        %379 = vmatprep.subr.mxu0 0.0
        %380 = vmatpush1.msra.mxu0 %v360
        %381 = vmatprep.subr.mxu0 0.0
        %382 = vmatpush1.msra.mxu0 %v361
        %383 = vmatprep.subr.mxu0 0.0
        %384 = vmatpush1.msra.mxu0 %v362
        %385 = vmatprep.subr.mxu0 0.0
        %386 = vmatpush1.msra.mxu0 %v363
        %387 = vmatprep.subr.mxu0 0.0
        %388 = vmatpush1.msra.mxu0 %v364
        %389 = vmatprep.subr.mxu0 0.0
        %390 = vmatpush1.msra.mxu0 %v365
        %391 = vmatprep.subr.mxu0 0.0
        %392 = vmatpush1.msra.mxu0 %v366
        %393 = vmatprep.subr.mxu0 0.0
        %394 = vmatpush1.msra.mxu0 %v367
        %395 = vmatprep.subr.mxu0 0.0
        %396 = vmatpush1.msra.mxu0 %v368
        %397 = vmatprep.subr.mxu0 0.0
        %398 = vmatpush1.msra.mxu0 %v369
        %399 = vmatprep.subr.mxu0 0.0
        %400 = vmatpush1.msra.mxu0 %v370
        %401 = vmatprep.subr.mxu0 0.0
        %402 = vmatpush1.msra.mxu0 %v371
        %403 = vmatprep.subr.mxu0 0.0
        %404 = vmatpush1.msra.mxu0 %v372
        %405 = vmatprep.subr.mxu0 0.0
        %406 = vmatpush1.msra.mxu0 0.0
        %407 = vmatprep.subr.mxu0 0.0
        %408 = vmatpush1.msra.mxu0 0.0
        %409 = vmatprep.subr.mxu0 0.0
        %410 = vmatpush1.msra.mxu0 0.0
        %411 = vmatprep.subr.mxu0 0.0
        %412 = vmatpush1.msra.mxu0 0.0
        %413 = vmatprep.subr.mxu0 0.0
        %414 = vmatpush1.msra.mxu0 0.0
        %415 = vmatprep.subr.mxu0 0.0
        %416 = vmatpush1.msra.mxu0 0.0
        %417 = vmatprep.subr.mxu0 0.0
        %418 = vmatpush1.msra.mxu0 0.0
        %419 = vmatprep.subr.mxu0 0.0
        %420 = vmatpush1.msra.mxu0 0.0
        %421 = vmatprep.subr.mxu0 0.0
        %422 = vmatpush1.msra.mxu0 0.0
        %423 = vmatprep.subr.mxu0 0.0
        %424 = vmatpush1.msra.mxu0 0.0
        %425 = vmatprep.subr.mxu0 0.0
        %426 = vmatpush1.msra.mxu0 0.0
        %427 = vmatprep.subr.mxu0 0.0
        %428 = vmatpush1.msra.mxu0 0.0
        %429 = vmatprep.subr.mxu0 0.0
        %430 = vmatpush1.msra.mxu0 0.0
        %431 = vmatprep.subr.mxu0 0.0
        %432 = vmatpush1.msra.mxu0 0.0
        %433 = vmatprep.subr.mxu0 0.0
        %434 = vmatpush1.msra.mxu0 0.0
        %435 = vmatprep.subr.mxu0 0.0
        %436 = vmatpush1.msra.mxu0 0.0
        %437 = vmatprep.mubr.f32.mxu0 0.0
        %438 = vmatmul.mubr.f32.gmra.mrb[0].mxu0 %v356
        %v439 = vpop.f32.mrb[0].mxu0
        %v440 = vadd.f32 0.0, %v439
        %v441 = vpop.f32.mrb[0].mxu0
        %442 = vdwg.mxu0
        %v443 = vld [vmem:[#allocation7] sm:$0xff]
        %v444 = vld [vmem:[#allocation7 + $0x8] sm:$0xff]
        %v445 = vld [vmem:[#allocation7 + $0x10] sm:$0xff]
        %v446 = vld [vmem:[#allocation7 + $0x18] sm:$0xff]
        %v447 = vld [vmem:[#allocation7 + $0x20] sm:$0xff]
        %v448 = vld [vmem:[#allocation7 + $0x28] sm:$0xff]
        %v449 = vld [vmem:[#allocation7 + $0x30] sm:$0xff]
        %v450 = vld [vmem:[#allocation7 + $0x38] sm:$0xff]
        %v451 = vld [vmem:[#allocation7 + $0x40] sm:$0xff]
        %v452 = vld [vmem:[#allocation7 + $0x48] sm:$0xff]
        %v453 = vld [vmem:[#allocation7 + $0x50] sm:$0xff]
        %v454 = vld [vmem:[#allocation7 + $0x58] sm:$0xff]
        %v455 = vld [vmem:[#allocation7 + $0x60] sm:$0xff]
        %v456 = vld [vmem:[#allocation7 + $0x68] sm:$0xff]
        %v457 = vld [vmem:[#allocation7 + $0x70] sm:$0xff]
        %v458 = vld [vmem:[#allocation7 + $0x78] sm:$0xff]
        %v459 = vld [vmem:[%s3] sm:$0x1]
        %v461 = vlaneseq
        %v462 = vshrl.u32 %v461, 7
        %v463 = vsub.s32 0, %v462
        %v464 = vrot.slane %v459, %v463
        %466 = vmatprep.subr.mxu0 0.0
        %467 = vmatpush1.msra.mxu0 %v443
        %468 = vmatprep.subr.mxu0 0.0
        %469 = vmatpush1.msra.mxu0 %v444
        %470 = vmatprep.subr.mxu0 0.0
        %471 = vmatpush1.msra.mxu0 %v445
        %472 = vmatprep.subr.mxu0 0.0
        %473 = vmatpush1.msra.mxu0 %v446
        %474 = vmatprep.subr.mxu0 0.0
        %475 = vmatpush1.msra.mxu0 %v447
        %476 = vmatprep.subr.mxu0 0.0
        %477 = vmatpush1.msra.mxu0 %v448
        %478 = vmatprep.subr.mxu0 0.0
        %479 = vmatpush1.msra.mxu0 %v449
        %480 = vmatprep.subr.mxu0 0.0
        %481 = vmatpush1.msra.mxu0 %v450
        %482 = vmatprep.subr.mxu0 0.0
        %483 = vmatpush1.msra.mxu0 %v451
        %484 = vmatprep.subr.mxu0 0.0
        %485 = vmatpush1.msra.mxu0 %v452
        %486 = vmatprep.subr.mxu0 0.0
        %487 = vmatpush1.msra.mxu0 %v453
        %488 = vmatprep.subr.mxu0 0.0
        %489 = vmatpush1.msra.mxu0 %v454
        %490 = vmatprep.subr.mxu0 0.0
        %491 = vmatpush1.msra.mxu0 %v455
        %492 = vmatprep.subr.mxu0 0.0
        %493 = vmatpush1.msra.mxu0 %v456
        %494 = vmatprep.subr.mxu0 0.0
        %495 = vmatpush1.msra.mxu0 %v457
        %496 = vmatprep.subr.mxu0 0.0
        %497 = vmatpush1.msra.mxu0 %v458
        %498 = vmatprep.subr.mxu0 0.0
        %499 = vmatpush1.msra.mxu0 0.0
        %500 = vmatprep.subr.mxu0 0.0
        %501 = vmatpush1.msra.mxu0 0.0
        %502 = vmatprep.subr.mxu0 0.0
        %503 = vmatpush1.msra.mxu0 0.0
        %504 = vmatprep.subr.mxu0 0.0
        %505 = vmatpush1.msra.mxu0 0.0
        %506 = vmatprep.subr.mxu0 0.0
        %507 = vmatpush1.msra.mxu0 0.0
        %508 = vmatprep.subr.mxu0 0.0
        %509 = vmatpush1.msra.mxu0 0.0
        %510 = vmatprep.subr.mxu0 0.0
        %511 = vmatpush1.msra.mxu0 0.0
        %512 = vmatprep.subr.mxu0 0.0
        %513 = vmatpush1.msra.mxu0 0.0
        %514 = vmatprep.subr.mxu0 0.0
        %515 = vmatpush1.msra.mxu0 0.0
        %516 = vmatprep.subr.mxu0 0.0
        %517 = vmatpush1.msra.mxu0 0.0
        %518 = vmatprep.subr.mxu0 0.0
        %519 = vmatpush1.msra.mxu0 0.0
        %520 = vmatprep.subr.mxu0 0.0
        %521 = vmatpush1.msra.mxu0 0.0
        %522 = vmatprep.subr.mxu0 0.0
        %523 = vmatpush1.msra.mxu0 0.0
        %524 = vmatprep.subr.mxu0 0.0
        %525 = vmatpush1.msra.mxu0 0.0
        %526 = vmatprep.subr.mxu0 0.0
        %527 = vmatpush1.msra.mxu0 0.0
        %528 = vmatprep.subr.mxu0 0.0
        %529 = vmatpush1.msra.mxu0 0.0
        %530 = vmatprep.mubr.f32.mxu0 0.0
        %531 = vmatmul.mubr.f32.gmra.mrb[0].mxu0 %v440
        %v532 = vpop.f32.mrb[0].mxu0
        %v533 = vadd.f32 %v464, %v532
        %v534 = vpop.f32.mrb[0].mxu0
        %535 = vdwg.mxu0
        %536 = vst [vmem:[%s241] sm:$0xff] %v533
        %s537 = sand.u32 %s119, 1
        %s538 = scalar_lea.sflag [#allocation4], %s537
        %s539 = sand.u32 %s119, 1
        %s540 = smul.addr %s539, 8
        %s541 = scalar_lea.vmem [#allocation8], %s540
        // Predicated region
        $region49: #{tpu_custom_call.1} parent=35 // pred_check
          %p542 = pneg %p129
        $region50: #{tpu_custom_call.1} parent=35 // pred_check_branch
          %544 = sbr.rel (%p542) target = $region52
        $region51: #{tpu_custom_call.1} parent=35 // pred_region
          %s546 = ssub.s32 128, 128
          %547 = vsyncadd %s538, %s546
          %s548 = smul.addr %s22, 128
          %s549 = scalar_lea.hbm %s4, %s548
          %s551 = sshll.u32 %s541, 4
          %s552 = int_to_ptr.vmem [resolvable:$true] %s551
          %554 = dma.vmem_to_hbm [thread:$0]  %s552, 128, %s549, %s538
        $region52: #{tpu_custom_call.1} parent=35 // pred_fallthru
          _
      $region36: #{tpu_custom_call.1} parent=5 // pred_fallthru
        _
      %p555 = scmp.le.s32.totalorder 2, %s17
      // Predicated region
      $region53: #{tpu_custom_call.1} parent=5 // pred_check
        %p556 = pneg %p555
      $region54: #{tpu_custom_call.1} parent=5 // pred_check_branch
        %558 = sbr.rel (%p556) target = $region56
      $region55: #{tpu_custom_call.1} parent=5 // pred_region
        %s559 = ssub.s32 %s17, 2
        // Predicated region
        $region57: #{tpu_custom_call.1} parent=55 // pred_check
          %p560 = pneg %p135
        $region58: #{tpu_custom_call.1} parent=55 // pred_check_branch
          %562 = sbr.rel (%p560) target = $region60
        $region59: #{tpu_custom_call.1} parent=55 // pred_region
          %s563 = sand.u32 %s120, 1
          %s564 = scalar_lea.sflag [#allocation4], %s563
          %s565 = sand.u32 %s120, 1
          %s566 = smul.addr %s565, 8
          %s567 = scalar_lea.vmem [#allocation8], %s566
          %568 = dma.done %s564, 128
        $region60: #{tpu_custom_call.1} parent=55 // pred_fallthru
          _
      $region56: #{tpu_custom_call.1} parent=5 // pred_fallthru
        _
    $region6: #{tpu_custom_call.1} parent=1 // loop_footer
      %s21 = sadd.s32 1, %s17
    $region7: #{tpu_custom_call.1} parent=1 // loop_footer_branch
      %16 = sbr.rel target = $region3
    $region8: #{tpu_custom_call.1} parent=1 // loop_exit
      _
    %569 = vsyncpa [#allocation3], 1
    %s570 = scalar_lea.sflag [#allocation3], 1
    %571 = vsyncpa %s570, 1
    %572 = vsyncpa [#allocation6], 1
    %573 = vsyncpa [#allocation4], 1
    %s574 = scalar_lea.sflag [#allocation4], 1
    %575 = vsyncpa %s574, 1

</llo_original>
